<compile_context>
chip_gen: v7x
topology: tpu7x:2x2x1
jax: 0.10.0
libtpu: 0.0.40
codegen_flags: <defaults>
</compile_context>

<pallas_src>
import math
import functools

import jax
import jax.numpy as jnp
from jax import lax
from jax.experimental import pallas as pl
from jax.experimental.pallas import tpu as pltpu


# Softmax denominator via the EUP approximate reciprocal (~1e-3 rel error).
# Set False for exact division if bit-closer parity with PyTorch is needed.
_APPROX_RECIP = True


# ------------------------------ device tuning --------------------------------

def _tpu_tuning():
    """Per-generation knobs: (vmem_limit_bytes, lm_head vocab tile)."""
    kind = ""
    try:
        kind = jax.devices()[0].device_kind.lower()
    except Exception:
        pass
    if "v5 lite" in kind or "v5e" in kind or "v6" in kind:
        # 128 MiB physical VMEM generations: larger scoped limit + vocab tile.
        return 96 * 1024 * 1024, 1024
    # v7x (64 MiB physical VMEM) and unknown chips: stay conservative.
    return 48 * 1024 * 1024, 512


_VMEM_LIMIT, _HEAD_TILE = _tpu_tuning()


def _pick_tile(total, pref):
    """Largest of {pref, pref/2, pref/4} dividing `total`, else `total`."""
    for cand in (pref, pref // 2, pref // 4):
        if cand >= 8 and total % cand == 0:
            return cand
    return total


def _single_buffered(block_shape):
    """Constant-index-map input: fetched once, kept in a single VMEM buffer."""
    rank = len(block_shape)
    index_map = lambda *_: (0,) * rank
    try:
        return pl.BlockSpec(block_shape, index_map,
                            pipeline_mode=pl.Buffered(1))
    except Exception:  # older BlockSpec signature: fall back to default buffering
        return pl.BlockSpec(block_shape, index_map)


# ----------------------------- shared math helpers ---------------------------

def _layernorm(x, w, b, eps=1e-5):
    mu = jnp.mean(x, axis=-1, keepdims=True)
    var = jnp.mean((x - mu) ** 2, axis=-1, keepdims=True)
    return (x - mu) * lax.rsqrt(var + eps) * w + b


def _gelu_tanh(x):
    c = math.sqrt(2.0 / math.pi)
    return 0.5 * x * (1.0 + jnp.tanh(c * (x + 0.044715 * x * x * x)))


def _mm(a, w, b=None):
    """bf16 x bf16 matmul with f32 accumulation (reference helper)."""
    out = jnp.dot(a.astype(jnp.bfloat16), w.astype(jnp.bfloat16),
                  preferred_element_type=jnp.float32)
    return out if b is None else out + b


# ------------------------------- Pallas kernels -------------------------------

def qkv_kernel(x_ref, ln1w, ln1b, wqkv_ref, bqkv_ref, q_ref, k_ref, v_ref, *,
               n_embd, q_scale):
    """LN1 + fused qkv projection for one (batch, T-tile); K=C, N=3C."""
    C = n_embd
    xn = _layernorm(x_ref[0], ln1w[0], ln1b[0]).astype(jnp.bfloat16)
    qkv = jnp.dot(xn, wqkv_ref[...],
                  preferred_element_type=jnp.float32) + bqkv_ref[0]
    # Fold the attention scale into q (saves a VPU pass over the (T,T) scores).
    q_ref[0] = (qkv[:, :C] * q_scale).astype(jnp.bfloat16)
    k_ref[0] = qkv[:, C:2 * C].astype(jnp.bfloat16)
    v_ref[0] = qkv[:, 2 * C:].astype(jnp.bfloat16)


def attn_kernel(x_ref, q_ref, k_ref, v_ref, mask_ref, wpr_ref, bpr_ref,
                o_ref, y_ref, *, n_head, head_dim):
    """Flash-style causal attention for one query tile, all heads.

    Grid = (B, T//TQ).  For each head (static unroll): online-softmax loop over
    the kv tiles that are at least partially visible (tiles 0..qi), so fully
    masked blocks are skipped.  Head outputs are staged into the (TQ, C) bf16
    scratch `y_ref`; the output projection is a single full-K (TQ,C)@(C,C)
    matmul with the complete wpr, plus bias and the residual add.
    """
    qi = pl.program_id(1)
    hd = head_dim
    tq = q_ref.shape[1]
    tk = tq
    bf16 = jnp.bfloat16

    def online(carry, s, vt):
        m, l, acc = carry
        m_new = jnp.maximum(m, jnp.max(s, axis=-1, keepdims=True))
        alpha = jnp.exp(m - m_new)
        p = jnp.exp(s - m_new)
        l_new = alpha * l + jnp.sum(p, axis=-1, keepdims=True)
        acc_new = alpha * acc + jnp.dot(p.astype(bf16), vt,
                                        preferred_element_type=jnp.float32)
        return m_new, l_new, acc_new

    for h in range(n_head):  # static unroll over heads
        qh = q_ref[0, :, h * hd:(h + 1) * hd]              # (TQ, hd) bf16 (scaled)

        def kv_body(t, carry):
            start = pl.multiple_of(t * tk, tk)
            kt = k_ref[0, pl.ds(start, tk), pl.ds(h * hd, hd)]
            vt = v_ref[0, pl.ds(start, tk), pl.ds(h * hd, hd)]
            s = lax.dot_general(qh, kt, (((1,), (1,)), ((), ())),
                                preferred_element_type=jnp.float32)
            return online(carry, s, vt)

        init = (jnp.full((tq, 1), -1e30, jnp.float32),
                jnp.zeros((tq, 1), jnp.float32),
                jnp.zeros((tq, hd), jnp.float32))
        # Fully visible kv tiles (below the diagonal tile); masked ones skipped.
        m, l, acc = lax.fori_loop(0, qi, kv_body, init)

        # Diagonal kv tile with the precomputed additive causal mask.
        start = pl.multiple_of(qi * tk, tk)
        kt = k_ref[0, pl.ds(start, tk), pl.ds(h * hd, hd)]
        vt = v_ref[0, pl.ds(start, tk), pl.ds(h * hd, hd)]
        s = lax.dot_general(qh, kt, (((1,), (1,)), ((), ())),
                            preferred_element_type=jnp.float32) + mask_ref[...]
        m, l, acc = online((m, l, acc), s, vt)

        if _APPROX_RECIP:
            inv = pl.reciprocal(l, approx=True)
        else:
            inv = 1.0 / l
        y_ref[:, h * hd:(h + 1) * hd] = (acc * inv).astype(bf16)

    # Single full-K output projection with the complete wpr (K = C).
    proj = jnp.dot(y_ref[...], wpr_ref[...], preferred_element_type=jnp.float32)
    o_ref[0] = x_ref[0] + proj + bpr_ref[0]


def mlp_kernel(x_ref, ln2w, ln2b, wfc_ref, bfc_ref, wp2_ref, bp2_ref,
               o_ref, acc_ref, xn_ref):
    """LN2 + MLP tiled over the 4C hidden dim; grid = (B, 4C//TF)."""
    f = pl.program_id(1)

    @pl.when(f == 0)
    def _init():
        # LN2 computed once per batch row (not per hidden tile).
        xn_ref[...] = _layernorm(x_ref[0], ln2w[0], ln2b[0]).astype(jnp.bfloat16)
        acc_ref[...] = jnp.zeros_like(acc_ref)

    h = jnp.dot(xn_ref[...], wfc_ref[...],
                preferred_element_type=jnp.float32) + bfc_ref[0]
    h = _gelu_tanh(h).astype(jnp.bfloat16)
    acc_ref[...] += jnp.dot(h, wp2_ref[...], preferred_element_type=jnp.float32)

    @pl.when(f == pl.num_programs(1) - 1)
    def _finalize():
        o_ref[0] = x_ref[0] + acc_ref[...] + bp2_ref[0]


def lnf_kernel(x_ref, lnfw, lnfb, o_ref):
    """Final LayerNorm, computed once per row (hoisted out of the vocab loop)."""
    o_ref[0] = _layernorm(x_ref[0], lnfw[0], lnfb[0]).astype(jnp.bfloat16)


def lm_head_kernel(xn_ref, wte_ref, o_ref, *, vocab, vocab_tile):
    """One lane-dense vocab tile of the tied lm_head; bf16 logits out,
    padded vocab columns masked to -inf (no post-kernel slice needed)."""
    j = pl.program_id(1)
    logits = jnp.dot(xn_ref[0], wte_ref[...], preferred_element_type=jnp.float32)
    col = j * vocab_tile + lax.broadcasted_iota(jnp.int32, logits.shape, 1)
    logits = jnp.where(col < vocab, logits, -jnp.inf)
    o_ref[0] = logits.astype(jnp.bfloat16)


# ------------------------------- pallas_call glue ------------------------------

def run_qkv(x, p, n_head):
    B, T, C = x.shape
    hd = C // n_head
    tq = _pick_tile(T, 128)
    nq = T // tq
    out_sd = jax.ShapeDtypeStruct((B, T, C), jnp.bfloat16)
    cost = pl.CostEstimate(
        flops=int(2 * B * T * C * 3 * C), transcendentals=0,
        bytes_accessed=int(B * T * C * 4 + C * 3 * C * 2 + 3 * B * T * C * 2))
    qkv_spec = pl.BlockSpec((1, tq, C), lambda b, i: (b, i, 0))
    return pl.pallas_call(
        functools.partial(qkv_kernel, n_embd=C, q_scale=1.0 / math.sqrt(hd)),
        out_shape=(out_sd, out_sd, out_sd),
        grid=(B, nq),
        in_specs=[
            pl.BlockSpec((1, tq, C), lambda b, i: (b, i, 0)),   # x
            _single_buffered((1, C)), _single_buffered((1, C)),  # ln1 w/b
            _single_buffered((C, 3 * C)),                         # wqkv
            _single_buffered((1, 3 * C)),                         # bqkv
        ],
        out_specs=(qkv_spec, qkv_spec, qkv_spec),
        compiler_params=pltpu.CompilerParams(
            dimension_semantics=("parallel", "parallel"),
            vmem_limit_bytes=_VMEM_LIMIT),
        cost_estimate=cost,
    )(x, p["ln1w"], p["ln1b"], p["wqkv"], p["bqkv"])


def run_attn(x, q, k, v, mask, p, n_head):
    B, T, C = x.shape
    hd = C // n_head
    tq = mask.shape[0]
    nq = T // tq
    cost = pl.CostEstimate(
        flops=int(2 * B * T * T * C + 2 * B * T * C * C),
        transcendentals=int(B * n_head * T * T // 2 + B * n_head * T * tq),
        bytes_accessed=int(B * T * C * (4 + 3 * 2 + 4) + C * C * 2))
    return pl.pallas_call(
        functools.partial(attn_kernel, n_head=n_head, head_dim=hd),
        out_shape=jax.ShapeDtypeStruct((B, T, C), jnp.float32),
        grid=(B, nq),
        in_specs=[
            pl.BlockSpec((1, tq, C), lambda b, i: (b, i, 0)),   # x (residual)
            pl.BlockSpec((1, tq, C), lambda b, i: (b, i, 0)),   # q (scaled, bf16)
            pl.BlockSpec((1, T, C), lambda b, i: (b, 0, 0)),    # k (full seq)
            pl.BlockSpec((1, T, C), lambda b, i: (b, 0, 0)),    # v (full seq)
            _single_buffered((tq, tq)),                          # additive causal mask
            _single_buffered((C, C)),                            # wpr (fetched once)
            _single_buffered((1, C)),                            # bpr
        ],
        out_specs=pl.BlockSpec((1, tq, C), lambda b, i: (b, i, 0)),
        scratch_shapes=[pltpu.VMEM((tq, C), jnp.bfloat16)],      # staged head outputs
        compiler_params=pltpu.CompilerParams(
            dimension_semantics=("parallel", "parallel"),
            vmem_limit_bytes=_VMEM_LIMIT),
        cost_estimate=cost,
    )(x, q, k, v, mask, p["wpr"], p["bpr"])


def run_mlp(x, p):
    B, T, C = x.shape
    F = 4 * C
    tf = _pick_tile(F, 512)
    nf = F // tf
    cost = pl.CostEstimate(
        flops=int(4 * B * T * C * F),
        transcendentals=int(B * T * F),
        bytes_accessed=int(2 * B * T * C * 4 + B * 2 * C * F * 2))
    return pl.pallas_call(
        mlp_kernel,
        out_shape=jax.ShapeDtypeStruct((B, T, C), jnp.float32),
        grid=(B, nf),
        in_specs=[
            pl.BlockSpec((1, T, C), lambda b, f: (b, 0, 0)),     # x (residual)
            _single_buffered((1, C)), _single_buffered((1, C)),   # ln2 w/b
            pl.BlockSpec((C, tf), lambda b, f: (0, f)),           # wfc tile
            pl.BlockSpec((1, tf), lambda b, f: (0, f)),           # bfc tile
            pl.BlockSpec((tf, C), lambda b, f: (f, 0)),           # wp2 tile
            _single_buffered((1, C)),                              # bp2
        ],
        out_specs=pl.BlockSpec((1, T, C), lambda b, f: (b, 0, 0)),
        scratch_shapes=[pltpu.VMEM((T, C), jnp.float32),           # MLP accumulator
                        pltpu.VMEM((T, C), jnp.bfloat16)],         # LN2(x), computed once
        compiler_params=pltpu.CompilerParams(
            dimension_semantics=("parallel", "arbitrary"),
            vmem_limit_bytes=_VMEM_LIMIT),
        cost_estimate=cost,
    )(x, p["ln2w"], p["ln2b"], p["wfc"], p["bfc"], p["wp2"], p["bp2"])


def run_lnf(x, lnfw, lnfb):
    B, T, C = x.shape
    return pl.pallas_call(
        lnf_kernel,
        out_shape=jax.ShapeDtypeStruct((B, T, C), jnp.bfloat16),
        grid=(B,),
        in_specs=[pl.BlockSpec((1, T, C), lambda b: (b, 0, 0)),
                  _single_buffered((1, C)), _single_buffered((1, C))],
        out_specs=pl.BlockSpec((1, T, C), lambda b: (b, 0, 0)),
        compiler_params=pltpu.CompilerParams(
            dimension_semantics=("parallel",),
            vmem_limit_bytes=_VMEM_LIMIT),
    )(x, lnfw, lnfb)


def run_lm_head(xn, wte_t_pad, vocab, tv):
    B, T, C = xn.shape
    Vpad = wte_t_pad.shape[1]
    nv = Vpad // tv
    cost = pl.CostEstimate(
        flops=int(2 * B * T * C * Vpad), transcendentals=0,
        bytes_accessed=int(B * T * C * 2 + B * C * Vpad * 2 + B * T * Vpad * 2))
    return pl.pallas_call(
        functools.partial(lm_head_kernel, vocab=vocab, vocab_tile=tv),
        out_shape=jax.ShapeDtypeStruct((B, T, Vpad), jnp.bfloat16),
        grid=(B, nv),
        in_specs=[pl.BlockSpec((1, T, C), lambda b, j: (b, 0, 0)),
                  pl.BlockSpec((C, tv), lambda b, j: (0, j))],
        out_specs=pl.BlockSpec((1, T, tv), lambda b, j: (b, 0, j)),
        compiler_params=pltpu.CompilerParams(
            dimension_semantics=("parallel", "parallel"),
            vmem_limit_bytes=_VMEM_LIMIT),
        cost_estimate=cost,
    )(xn, wte_t_pad)


def gpt_forward(idx, params, n_head):
    """Returns bf16 logits over the padded vocab; pad columns are -inf."""
    # TODO(synk): token/position embedding lookup (dynamic gather) stays
    # plain-JAX glue; there is no clean rectangular-BlockSpec equivalent.
    wte, wpe = params["wte"], params["wpe"]
    T = idx.shape[1]
    x = jnp.take(wte, idx, axis=0) + wpe[:T][None]          # (B, T, C) f32

    tq = _pick_tile(T, 128)
    # Additive causal mask for one diagonal (tq, tq) tile; constant index_map
    # input shared by every grid step (no per-step iota/compare/where).
    row = lax.broadcasted_iota(jnp.int32, (tq, tq), 0)
    col = lax.broadcasted_iota(jnp.int32, (tq, tq), 1)
    mask = jnp.where(col <= row, 0.0, -1e30).astype(jnp.float32)

    for lp in params["blocks"]:
        q, k, v = run_qkv(x, lp, n_head)
        x = run_attn(x, q, k, v, mask, lp, n_head)
        x = run_mlp(x, lp)

    xn = run_lnf(x, params["lnfw"], params["lnfb"])
    return run_lm_head(xn, params["wte_t_pad"], wte.shape[0],
                       params["head_tile"])


# --------------------------- pure-JAX reference (check) ------------------------

def gpt_forward_ref(idx, params, n_head):
    wte, wpe = params["wte"], params["wpe"]
    B, T = idx.shape
    x = jnp.take(wte, idx, axis=0) + wpe[:T][None]
    C = x.shape[-1]
    hd = C // n_head
    bf16 = jnp.bfloat16
    for p in params["blocks"]:
        h = _layernorm(x, p["ln1w"][0], p["ln1b"][0])
        qkv = _mm(h, p["wqkv"], p["bqkv"][0])
        q, k, v = jnp.split(qkv, 3, axis=-1)
        q = q.reshape(B, T, n_head, hd).transpose(0, 2, 1, 3).astype(bf16)
        k = k.reshape(B, T, n_head, hd).transpose(0, 2, 1, 3).astype(bf16)
        v = v.reshape(B, T, n_head, hd).transpose(0, 2, 1, 3).astype(bf16)
        s = jnp.einsum("bhtd,bhsd->bhts", q, k,
                       preferred_element_type=jnp.float32) / math.sqrt(hd)
        m = jnp.tril(jnp.ones((T, T), dtype=bool))
        s = jnp.where(m, s, -1e30)
        a = jax.nn.softmax(s, axis=-1)
        y = jnp.einsum("bhts,bhsd->bhtd", a.astype(bf16), v,
                       preferred_element_type=jnp.float32)
        y = y.transpose(0, 2, 1, 3).reshape(B, T, C)
        x = x + _mm(y, p["wpr"], p["bpr"][0])
        h2 = _layernorm(x, p["ln2w"][0], p["ln2b"][0])
        f = _gelu_tanh(_mm(h2, p["wfc"], p["bfc"][0]))
        x = x + _mm(f, p["wp2"], p["bp2"][0])
    xn = _layernorm(x, params["lnfw"][0], params["lnfb"][0])
    return _mm(xn, params["wte"].astype(bf16).T)


# -------------------------------- parameter init -------------------------------

def init_params(key, *, vocab, block_size, n_layer, n_embd, head_tile=_HEAD_TILE):
    C = n_embd
    std = 0.2  # matches GPT._init_weights (normal_(mean=0.0, std=0.2))
    bf16 = jnp.bfloat16
    ks = jax.random.split(key, 2 + n_layer)
    wte = std * jax.random.normal(ks[0], (vocab, C), jnp.float32)
    wpe = std * jax.random.normal(ks[1], (block_size, C), jnp.float32)
    blocks = []
    for l in range(n_layer):
        k0, k1, k2, k3 = jax.random.split(ks[2 + l], 4)
        blocks.append(dict(
            ln1w=jnp.ones((1, C), jnp.float32),
            ln1b=jnp.zeros((1, C), jnp.float32),
            # nn.Linear weight (out,in) -> stored (in,out), bf16 for the MXU.
            wqkv=(std * jax.random.normal(k0, (C, 3 * C), jnp.float32)).astype(bf16),
            bqkv=jnp.zeros((1, 3 * C), jnp.float32),
            wpr=(std * jax.random.normal(k1, (C, C), jnp.float32)).astype(bf16),
            bpr=jnp.zeros((1, C), jnp.float32),
            ln2w=jnp.ones((1, C), jnp.float32),
            ln2b=jnp.zeros((1, C), jnp.float32),
            wfc=(std * jax.random.normal(k2, (C, 4 * C), jnp.float32)).astype(bf16),
            bfc=jnp.zeros((1, 4 * C), jnp.float32),
            wp2=(std * jax.random.normal(k3, (4 * C, C), jnp.float32)).astype(bf16),
            bp2=jnp.zeros((1, C), jnp.float32),
        ))
    # Tied lm_head weight: pre-transposed (C, Vpad) bf16, vocab padded to a
    # multiple of the lane-dense vocab tile; pad columns are masked in-kernel.
    Vpad = ((vocab + head_tile - 1) // head_tile) * head_tile
    wte_pad = jnp.zeros((Vpad, C), jnp.float32).at[:vocab].set(wte)
    wte_t_pad = wte_pad.astype(bf16).T                     # (C, Vpad)
    return dict(
        wte=wte, wpe=wpe, blocks=blocks,
        lnfw=jnp.ones((1, C), jnp.float32),
        lnfb=jnp.zeros((1, C), jnp.float32),
        wte_t_pad=wte_t_pad,
        head_tile=head_tile,
    )


# --------------------------------------- main ----------------------------------

if __name__ == "__main__":
    # small, forward-consistent shapes
    B, T = 2, 8
    vocab, block_size, n_layer, n_head, n_embd = 512, 8, 2, 2, 32

    key = jax.random.PRNGKey(0)
    kp, ki = jax.random.split(key)
    params = init_params(kp, vocab=vocab, block_size=block_size,
                         n_layer=n_layer, n_embd=n_embd)
    idx = jax.random.randint(ki, (B, T), 0, vocab, dtype=jnp.int32)

    logits_pad = jax.block_until_ready(gpt_forward(idx, params, n_head))
    Vpad = params["wte_t_pad"].shape[1]
    assert logits_pad.shape == (B, T, Vpad), logits_pad.shape
    assert logits_pad.dtype == jnp.bfloat16, logits_pad.dtype

    # correctness check against a pure-JAX reference of the same (bf16) math
    logits = logits_pad[:, :, :vocab].astype(jnp.float32)
    ref = jax.block_until_ready(gpt_forward_ref(idx, params, n_head))
    err = float(jnp.max(jnp.abs(logits - ref)))
    scale = float(jnp.max(jnp.abs(ref)))
    assert err <= 3e-2 * max(scale, 1.0), (err, scale)

    print("KERNEL_OK")
</pallas_src>

<mosaic_0001>
module attributes {stable_mosaic.version = 11 : i64} {
  func.func @qkv_kernel(%arg0: i32, %arg1: i32, %arg2: memref<1x8x32xf32, #tpu.memory_space<vmem>>, %arg3: memref<1x32xf32, #tpu.memory_space<vmem>>, %arg4: memref<1x32xf32, #tpu.memory_space<vmem>>, %arg5: memref<32x96xbf16, #tpu.memory_space<vmem>>, %arg6: memref<1x96xf32, #tpu.memory_space<vmem>>, %arg7: memref<1x8x32xbf16, #tpu.memory_space<vmem>>, %arg8: memref<1x8x32xbf16, #tpu.memory_space<vmem>>, %arg9: memref<1x8x32xbf16, #tpu.memory_space<vmem>>) attributes {dimension_semantics = [#tpu.dimension_semantics<parallel>, #tpu.dimension_semantics<parallel>], iteration_bounds = array<i64: 2, 1>, scalar_prefetch = 0 : i64, scratch_operands = 0 : i64, tpu.core_type = #tpu.core_type<tc>, window_params = [{transform_indices = @transform_0, window_bounds = array<i64: 1, 8, 32>}, {pipeline_mode = #tpu.pipeline_mode<synchronous>, transform_indices = @transform_1, window_bounds = array<i64: 1, 32>}, {pipeline_mode = #tpu.pipeline_mode<synchronous>, transform_indices = @transform_2, window_bounds = array<i64: 1, 32>}, {pipeline_mode = #tpu.pipeline_mode<synchronous>, transform_indices = @transform_3, window_bounds = array<i64: 32, 96>}, {pipeline_mode = #tpu.pipeline_mode<synchronous>, transform_indices = @transform_4, window_bounds = array<i64: 1, 96>}, {transform_indices = @transform_5, window_bounds = array<i64: 1, 8, 32>}, {transform_indices = @transform_6, window_bounds = array<i64: 1, 8, 32>}, {transform_indices = @transform_7, window_bounds = array<i64: 1, 8, 32>}]} {
    %c0 = arith.constant 0 : index
    %c0_0 = arith.constant 0 : index
    %c0_1 = arith.constant 0 : index
    %0 = vector.load %arg2[%c0, %c0_0, %c0_1] : memref<1x8x32xf32, #tpu.memory_space<vmem>>, vector<1x8x32xf32>
    %1 = vector.shape_cast %0 : vector<1x8x32xf32> to vector<8x32xf32>
    %c0_2 = arith.constant 0 : index
    %c0_3 = arith.constant 0 : index
    %2 = vector.load %arg3[%c0_2, %c0_3] : memref<1x32xf32, #tpu.memory_space<vmem>>, vector<1x32xf32>
    %3 = vector.shape_cast %2 : vector<1x32xf32> to vector<32xf32>
    %c0_4 = arith.constant 0 : index
    %c0_5 = arith.constant 0 : index
    %4 = vector.load %arg4[%c0_4, %c0_5] : memref<1x32xf32, #tpu.memory_space<vmem>>, vector<1x32xf32>
    %5 = vector.shape_cast %4 : vector<1x32xf32> to vector<32xf32>
    %cst = arith.constant dense<0.000000e+00> : vector<8xf32>
    %6 = vector.multi_reduction <add>, %1, %cst [1] : vector<8x32xf32> to vector<8xf32>
    %7 = vector.shape_cast %6 : vector<8xf32> to vector<8x1xf32>
    %cst_6 = arith.constant 3.200000e+01 : f32
    %8 = vector.broadcast %cst_6 : f32 to vector<8x1xf32>
    %9 = arith.divf %7, %8 : vector<8x1xf32>
    %10 = vector.broadcast %9 : vector<8x1xf32> to vector<8x32xf32>
    %11 = arith.subf %1, %10 : vector<8x32xf32>
    %12 = arith.mulf %11, %11 : vector<8x32xf32>
    %cst_7 = arith.constant dense<0.000000e+00> : vector<8xf32>
    %13 = vector.multi_reduction <add>, %12, %cst_7 [1] : vector<8x32xf32> to vector<8xf32>
    %14 = vector.shape_cast %13 : vector<8xf32> to vector<8x1xf32>
    %cst_8 = arith.constant 3.200000e+01 : f32
    %15 = vector.broadcast %cst_8 : f32 to vector<8x1xf32>
    %16 = arith.divf %14, %15 : vector<8x1xf32>
    %17 = vector.broadcast %9 : vector<8x1xf32> to vector<8x32xf32>
    %18 = arith.subf %1, %17 : vector<8x32xf32>
    %cst_9 = arith.constant 9.99999974E-6 : f32
    %19 = vector.broadcast %cst_9 : f32 to vector<8x1xf32>
    %20 = arith.addf %16, %19 : vector<8x1xf32>
    %21 = math.rsqrt %20 : vector<8x1xf32>
    %22 = vector.broadcast %21 : vector<8x1xf32> to vector<8x32xf32>
    %23 = arith.mulf %18, %22 : vector<8x32xf32>
    %24 = vector.shape_cast %3 : vector<32xf32> to vector<1x32xf32>
    %25 = vector.broadcast %24 : vector<1x32xf32> to vector<8x32xf32>
    %26 = arith.mulf %23, %25 : vector<8x32xf32>
    %27 = vector.shape_cast %5 : vector<32xf32> to vector<1x32xf32>
    %28 = vector.broadcast %27 : vector<1x32xf32> to vector<8x32xf32>
    %29 = arith.addf %26, %28 : vector<8x32xf32>
    %30 = arith.truncf %29 : vector<8x32xf32> to vector<8x32xbf16>
    %c0_10 = arith.constant 0 : index
    %c0_11 = arith.constant 0 : index
    %31 = vector.load %arg5[%c0_10, %c0_11] : memref<32x96xbf16, #tpu.memory_space<vmem>>, vector<32x96xbf16>
    %cst_12 = arith.constant dense<0.000000e+00> : vector<8x96xf32>
    %32 = tpu.matmul %30, %31, %cst_12 {dimension_numbers = #tpu.dot_dimension_numbers<[1], [0], [0], [1], [0, 0, 1, 1], [], []>} : vector<8x32xbf16>, vector<32x96xbf16>, vector<8x96xf32> -> vector<8x96xf32>
    %c0_13 = arith.constant 0 : index
    %c0_14 = arith.constant 0 : index
    %33 = vector.load %arg6[%c0_13, %c0_14] : memref<1x96xf32, #tpu.memory_space<vmem>>, vector<1x96xf32>
    %34 = vector.shape_cast %33 : vector<1x96xf32> to vector<96xf32>
    %35 = vector.shape_cast %34 : vector<96xf32> to vector<1x96xf32>
    %36 = vector.broadcast %35 : vector<1x96xf32> to vector<8x96xf32>
    %37 = arith.addf %32, %36 : vector<8x96xf32>
    %38 = vector.extract_strided_slice %37 {offsets = [0, 0], sizes = [8, 32], strides = [1, 1]} : vector<8x96xf32> to vector<8x32xf32>
    %cst_15 = arith.constant 2.500000e-01 : f32
    %39 = vector.broadcast %cst_15 : f32 to vector<8x32xf32>
    %40 = arith.mulf %38, %39 : vector<8x32xf32>
    %41 = arith.truncf %40 : vector<8x32xf32> to vector<8x32xbf16>
    %c0_16 = arith.constant 0 : index
    %c0_17 = arith.constant 0 : index
    %c0_18 = arith.constant 0 : index
    %42 = vector.load %arg7[%c0_16, %c0_17, %c0_18] : memref<1x8x32xbf16, #tpu.memory_space<vmem>>, vector<1x8x32xbf16>
    %43 = vector.shape_cast %42 : vector<1x8x32xbf16> to vector<8x32xbf16>
    %44 = vector.shape_cast %41 : vector<8x32xbf16> to vector<1x8x32xbf16>
    tpu.vector_store %arg7[%c0_16, %c0_17, %c0_18], %44 {strides = array<i32>} : memref<1x8x32xbf16, #tpu.memory_space<vmem>>, vector<1x8x32xbf16>,
    %45 = vector.extract_strided_slice %37 {offsets = [0, 32], sizes = [8, 32], strides = [1, 1]} : vector<8x96xf32> to vector<8x32xf32>
    %46 = arith.truncf %45 : vector<8x32xf32> to vector<8x32xbf16>
    %c0_19 = arith.constant 0 : index
    %c0_20 = arith.constant 0 : index
    %c0_21 = arith.constant 0 : index
    %47 = vector.load %arg8[%c0_19, %c0_20, %c0_21] : memref<1x8x32xbf16, #tpu.memory_space<vmem>>, vector<1x8x32xbf16>
    %48 = vector.shape_cast %47 : vector<1x8x32xbf16> to vector<8x32xbf16>
    %49 = vector.shape_cast %46 : vector<8x32xbf16> to vector<1x8x32xbf16>
    tpu.vector_store %arg8[%c0_19, %c0_20, %c0_21], %49 {strides = array<i32>} : memref<1x8x32xbf16, #tpu.memory_space<vmem>>, vector<1x8x32xbf16>,
    %50 = vector.extract_strided_slice %37 {offsets = [0, 64], sizes = [8, 32], strides = [1, 1]} : vector<8x96xf32> to vector<8x32xf32>
    %51 = arith.truncf %50 : vector<8x32xf32> to vector<8x32xbf16>
    %c0_22 = arith.constant 0 : index
    %c0_23 = arith.constant 0 : index
    %c0_24 = arith.constant 0 : index
    %52 = vector.load %arg9[%c0_22, %c0_23, %c0_24] : memref<1x8x32xbf16, #tpu.memory_space<vmem>>, vector<1x8x32xbf16>
    %53 = vector.shape_cast %52 : vector<1x8x32xbf16> to vector<8x32xbf16>
    %54 = vector.shape_cast %51 : vector<8x32xbf16> to vector<1x8x32xbf16>
    tpu.vector_store %arg9[%c0_22, %c0_23, %c0_24], %54 {strides = array<i32>} : memref<1x8x32xbf16, #tpu.memory_space<vmem>>, vector<1x8x32xbf16>,
    return
  }
  func.func @transform_0(%arg0: i32, %arg1: i32) -> (i32, i32, i32) {
    %c0_i32 = arith.constant 0 : i32
    %c0_i32_0 = arith.constant 0 : i32
    return %arg0, %arg1, %c0_i32 : i32, i32, i32
  }
  func.func @transform_1(%arg0: i32, %arg1: i32) -> (i32, i32) {
    %c0_i32 = arith.constant 0 : i32
    %c0_i32_0 = arith.constant 0 : i32
    %c0_i32_1 = arith.constant 0 : i32
    return %c0_i32, %c0_i32_0 : i32, i32
  }
  func.func @transform_2(%arg0: i32, %arg1: i32) -> (i32, i32) {
    %c0_i32 = arith.constant 0 : i32
    %c0_i32_0 = arith.constant 0 : i32
    %c0_i32_1 = arith.constant 0 : i32
    return %c0_i32, %c0_i32_0 : i32, i32
  }
  func.func @transform_3(%arg0: i32, %arg1: i32) -> (i32, i32) {
    %c0_i32 = arith.constant 0 : i32
    %c0_i32_0 = arith.constant 0 : i32
    %c0_i32_1 = arith.constant 0 : i32
    return %c0_i32, %c0_i32_0 : i32, i32
  }
  func.func @transform_4(%arg0: i32, %arg1: i32) -> (i32, i32) {
    %c0_i32 = arith.constant 0 : i32
    %c0_i32_0 = arith.constant 0 : i32
    %c0_i32_1 = arith.constant 0 : i32
    return %c0_i32, %c0_i32_0 : i32, i32
  }
  func.func @transform_5(%arg0: i32, %arg1: i32) -> (i32, i32, i32) {
    %c0_i32 = arith.constant 0 : i32
    %c0_i32_0 = arith.constant 0 : i32
    return %arg0, %arg1, %c0_i32 : i32, i32, i32
  }
  func.func @transform_6(%arg0: i32, %arg1: i32) -> (i32, i32, i32) {
    %c0_i32 = arith.constant 0 : i32
    %c0_i32_0 = arith.constant 0 : i32
    return %arg0, %arg1, %c0_i32 : i32, i32, i32
  }
  func.func @transform_7(%arg0: i32, %arg1: i32) -> (i32, i32, i32) {
    %c0_i32 = arith.constant 0 : i32
    %c0_i32_0 = arith.constant 0 : i32
    return %arg0, %arg1, %c0_i32 : i32, i32, i32
  }
}

</mosaic_0001>

<llo_original>
// kernel: tpu_custom_call.1
$region0: #{tpu_custom_call.1}
  #allocation0 [shape = 'u32[]', space=smem, size = 0x4, offset = 0x4, fixed_abs, tag = 'smem constant byte address 0x4 - core index']
  #allocation1 [shape = 'u32[144,128]{1,0:T(1,128)}', space=vmem, size = 0x12000, scoped, tag = 'internal scratch']
  %s0 = inlined_call_operand.hbm [shape: f32[2,8,32], index: 0, kind: input, shape index: {}]
  %s1 = inlined_call_operand.vmem [shape: f32[1,32], index: 1, kind: input, shape index: {}]
  %s2 = inlined_call_operand.vmem [shape: f32[1,32], index: 2, kind: input, shape index: {}]
  %s3 = inlined_call_operand.hbm [shape: bf16[32,96], index: 3, kind: input, shape index: {}]
  %s4 = inlined_call_operand.vmem [shape: f32[1,96], index: 4, kind: input, shape index: {}]
  %s5 = inlined_call_operand.hbm [shape: bf16[2,8,32], index: 5, kind: output, shape index: {0}]
  %s6 = inlined_call_operand.hbm [shape: bf16[2,8,32], index: 6, kind: output, shape index: {1}]
  %s7 = inlined_call_operand.hbm [shape: bf16[2,8,32], index: 7, kind: output, shape index: {2}]
  %8 = xla_tuple %s5, %s6, %s7
  %s9 = sld [smem:[#allocation0]]
  $region77: #{tpu_custom_call.1} parent=0
    _
  %s11 = ssub.s32 1, %s9
  %s12 = scalar_select 0, %s11, %s9
  $region1: #{tpu_custom_call.1} parent=0
    #allocation2 [shape = 'u8[8192]{0}', space=vmem, size = 0x2000, scoped, tag = 'input window, operand 0']
    #allocation3 [shape = 's32[2]{0}', space=sflag, size = 0x8, scoped, tag = 'scoped memory for tpu_custom_call.1']
    #allocation4 [shape = 's32[2]{0}', space=sflag, size = 0x8, scoped, tag = 'scoped memory for tpu_custom_call.1']
    #allocation5 [shape = 'u8[8192]{0}', space=vmem, size = 0x2000, scoped, tag = 'input window, operand 3, single buffered']
    #allocation6 [shape = 's32[1]{0}', space=sflag, size = 0x4, scoped, tag = 'scoped memory for tpu_custom_call.1']
    #allocation7 [shape = 'u8[4096]{0}', space=vmem, size = 0x1000, scoped, tag = 'output window, operand 0']
    #allocation8 [shape = 'u8[4096]{0}', space=vmem, size = 0x1000, scoped, tag = 'output window, operand 1']
    #allocation9 [shape = 's32[2]{0}', space=sflag, size = 0x8, scoped, tag = 'scoped memory for tpu_custom_call.1']
    #allocation10 [shape = 'u8[4096]{0}', space=vmem, size = 0x1000, scoped, tag = 'output window, operand 2']
    %13 = vsyncpa [#allocation3], 0
    %s14 = scalar_lea.sflag [#allocation3], 1
    %15 = vsyncpa %s14, 0
    %16 = vsyncpa [#allocation6], 0
    %17 = vsyncpa [#allocation4], 0
    %s18 = scalar_lea.sflag [#allocation4], 1
    %19 = vsyncpa %s18, 0
    %20 = vsyncpa [#allocation9], 0
    %s21 = scalar_lea.sflag [#allocation9], 1
    %22 = vsyncpa %s21, 0
    loop: start=0, step=1, limit=4
    $region2: #{tpu_custom_call.1} parent=1 // loop_pre_header
      _
    $region3: #{tpu_custom_call.1} parent=1 // loop_header
      %s24 = sphi 0, %s28
      %p25 = scmp.ge.s32.totalorder %s24, 4
      %s31 = sphi 0, %s43
      %s32 = sphi 0, %s39
      %s33 = sphi 0, %s31
      %s34 = sphi 0, %s32
      %s35 = sphi 0, %s33
      %s36 = sphi 0, %s34
      %s48 = sphi 0, %s50
      %s51 = sphi 0, %s48
      %s52 = sphi 0, %s51
      %s68 = sphi 0, %s52
      %s72 = sphi 0, %s72
      %s74 = sphi 0, %s72
      %s75 = sphi 0, %s74
      %s89 = sphi 0, %s75
      %s93 = sphi 0, %s93
      %s95 = sphi 0, %s93
      %s96 = sphi 0, %s95
      %s110 = sphi 0, %s96
      %s114 = sphi 0, %s114
      %s116 = sphi 0, %s114
      %s117 = sphi 0, %s116
      %s131 = sphi 0, %s117
      %s135 = sphi 0, %s135
      %s137 = sphi 0, %s135
      %s138 = sphi 0, %s137
      %s152 = sphi 0, %s138
      %s160 = sphi 0, %s162
      %s163 = sphi 0, %s160
      %s164 = sphi 0, %s163
      %s180 = sphi 0, %s164
      %s188 = sphi 0, %s190
      %s191 = sphi 0, %s188
      %s192 = sphi 0, %s191
      %s208 = sphi 0, %s192
      %s216 = sphi 0, %s218
      %s219 = sphi 0, %s216
      %s220 = sphi 0, %s219
      %s236 = sphi 0, %s220
    $region4: #{tpu_custom_call.1} parent=1 // loop_header_branch
      %27 = sbr.rel (%p25) target = $region8
    $region5: #{tpu_custom_call.1} parent=1 // loop_body
      %s29 = ssub.s32 %s24, 1
      %s30 = ssub.s32 %s24, 2
      %s37 = sadd.s32 1, %s32
      %p38 = scmp.ge.s32.totalorder %s37, 1
      %s39 = scalar_select %p38, 0, %s37
      %s40 = sadd.s32 1, %s31
      %s41 = scalar_select %p38, %s40, %s31
      %p42 = scmp.ge.s32.totalorder %s41, 2
      %s43 = scalar_select %p42, 0, %s41
      %s44 = ssub.s32 %s31, %s43
      %s45 = ssub.s32 %s32, %s39
      %s46 = sor.u32 %s44, %s45
      %p47 = scmp.eq.s32.totalorder %s46, 0
      %s49 = sadd.s32 %s48, 1
      %s50 = scalar_select %p47, %s48, %s49
      %p53 = pneg %p47
      %p54 = scmp.eq.s32.totalorder %s24, 1
      %p55 = por %p53, %p54
      %p56 = scmp.ne.s32.totalorder %s48, %s51
      %p57 = scmp.eq.s32.totalorder %s24, 0
      %p58 = por %p56, %p57
      %p59 = scmp.ne.s32.totalorder %s48, %s51
      %p60 = scmp.eq.s32.totalorder %s29, 1
      %p61 = por %p59, %p60
      %p62 = scmp.ne.s32.totalorder %s51, %s52
      %p63 = scmp.eq.s32.totalorder %s29, 0
      %p64 = por %p62, %p63
      %p65 = scmp.ne.s32.totalorder %s51, %s52
      %p66 = scmp.eq.s32.totalorder %s30, 1
      %p67 = por %p65, %p66
      %p69 = scmp.ne.s32.totalorder %s52, %s68
      %p70 = scmp.eq.s32.totalorder %s30, 0
      %p71 = por %p69, %p70
      %s73 = sadd.s32 %s72, 1
      %p76 = scmp.eq.s32.totalorder %s24, 1
      %p77 = scmp.ne.s32.totalorder %s72, %s74
      %p78 = scmp.eq.s32.totalorder %s24, 0
      %p79 = por %p77, %p78
      %p80 = scmp.ne.s32.totalorder %s72, %s74
      %p81 = scmp.eq.s32.totalorder %s29, 1
      %p82 = por %p80, %p81
      %p83 = scmp.ne.s32.totalorder %s74, %s75
      %p84 = scmp.eq.s32.totalorder %s29, 0
      %p85 = por %p83, %p84
      %p86 = scmp.ne.s32.totalorder %s74, %s75
      %p87 = scmp.eq.s32.totalorder %s30, 1
      %p88 = por %p86, %p87
      %p90 = scmp.ne.s32.totalorder %s75, %s89
      %p91 = scmp.eq.s32.totalorder %s30, 0
      %p92 = por %p90, %p91
      %s94 = sadd.s32 %s93, 1
      %p97 = scmp.eq.s32.totalorder %s24, 1
      %p98 = scmp.ne.s32.totalorder %s93, %s95
      %p99 = scmp.eq.s32.totalorder %s24, 0
      %p100 = por %p98, %p99
      %p101 = scmp.ne.s32.totalorder %s93, %s95
      %p102 = scmp.eq.s32.totalorder %s29, 1
      %p103 = por %p101, %p102
      %p104 = scmp.ne.s32.totalorder %s95, %s96
      %p105 = scmp.eq.s32.totalorder %s29, 0
      %p106 = por %p104, %p105
      %p107 = scmp.ne.s32.totalorder %s95, %s96
      %p108 = scmp.eq.s32.totalorder %s30, 1
      %p109 = por %p107, %p108
      %p111 = scmp.ne.s32.totalorder %s96, %s110
      %p112 = scmp.eq.s32.totalorder %s30, 0
      %p113 = por %p111, %p112
      %s115 = sadd.s32 %s114, 1
      %p118 = scmp.eq.s32.totalorder %s24, 1
      %p119 = scmp.ne.s32.totalorder %s114, %s116
      %p120 = scmp.eq.s32.totalorder %s24, 0
      %p121 = por %p119, %p120
      %p122 = scmp.ne.s32.totalorder %s114, %s116
      %p123 = scmp.eq.s32.totalorder %s29, 1
      %p124 = por %p122, %p123
      %p125 = scmp.ne.s32.totalorder %s116, %s117
      %p126 = scmp.eq.s32.totalorder %s29, 0
      %p127 = por %p125, %p126
      %p128 = scmp.ne.s32.totalorder %s116, %s117
      %p129 = scmp.eq.s32.totalorder %s30, 1
      %p130 = por %p128, %p129
      %p132 = scmp.ne.s32.totalorder %s117, %s131
      %p133 = scmp.eq.s32.totalorder %s30, 0
      %p134 = por %p132, %p133
      %s136 = sadd.s32 %s135, 1
      %p139 = scmp.eq.s32.totalorder %s24, 1
      %p140 = scmp.ne.s32.totalorder %s135, %s137
      %p141 = scmp.eq.s32.totalorder %s24, 0
      %p142 = por %p140, %p141
      %p143 = scmp.ne.s32.totalorder %s135, %s137
      %p144 = scmp.eq.s32.totalorder %s29, 1
      %p145 = por %p143, %p144
      %p146 = scmp.ne.s32.totalorder %s137, %s138
      %p147 = scmp.eq.s32.totalorder %s29, 0
      %p148 = por %p146, %p147
      %p149 = scmp.ne.s32.totalorder %s137, %s138
      %p150 = scmp.eq.s32.totalorder %s30, 1
      %p151 = por %p149, %p150
      %p153 = scmp.ne.s32.totalorder %s138, %s152
      %p154 = scmp.eq.s32.totalorder %s30, 0
      %p155 = por %p153, %p154
      %s156 = ssub.s32 %s31, %s43
      %s157 = ssub.s32 %s32, %s39
      %s158 = sor.u32 %s156, %s157
      %p159 = scmp.eq.s32.totalorder %s158, 0
      %s161 = sadd.s32 %s160, 1
      %s162 = scalar_select %p159, %s160, %s161
      %p165 = pneg %p159
      %p166 = scmp.eq.s32.totalorder %s24, 1
      %p167 = por %p165, %p166
      %p168 = scmp.ne.s32.totalorder %s160, %s163
      %p169 = scmp.eq.s32.totalorder %s24, 0
      %p170 = por %p168, %p169
      %p171 = scmp.ne.s32.totalorder %s160, %s163
      %p172 = scmp.eq.s32.totalorder %s29, 1
      %p173 = por %p171, %p172
      %p174 = scmp.ne.s32.totalorder %s163, %s164
      %p175 = scmp.eq.s32.totalorder %s29, 0
      %p176 = por %p174, %p175
      %p177 = scmp.ne.s32.totalorder %s163, %s164
      %p178 = scmp.eq.s32.totalorder %s30, 1
      %p179 = por %p177, %p178
      %p181 = scmp.ne.s32.totalorder %s164, %s180
      %p182 = scmp.eq.s32.totalorder %s30, 0
      %p183 = por %p181, %p182
      %s184 = ssub.s32 %s31, %s43
      %s185 = ssub.s32 %s32, %s39
      %s186 = sor.u32 %s184, %s185
      %p187 = scmp.eq.s32.totalorder %s186, 0
      %s189 = sadd.s32 %s188, 1
      %s190 = scalar_select %p187, %s188, %s189
      %p193 = pneg %p187
      %p194 = scmp.eq.s32.totalorder %s24, 1
      %p195 = por %p193, %p194
      %p196 = scmp.ne.s32.totalorder %s188, %s191
      %p197 = scmp.eq.s32.totalorder %s24, 0
      %p198 = por %p196, %p197
      %p199 = scmp.ne.s32.totalorder %s188, %s191
      %p200 = scmp.eq.s32.totalorder %s29, 1
      %p201 = por %p199, %p200
      %p202 = scmp.ne.s32.totalorder %s191, %s192
      %p203 = scmp.eq.s32.totalorder %s29, 0
      %p204 = por %p202, %p203
      %p205 = scmp.ne.s32.totalorder %s191, %s192
      %p206 = scmp.eq.s32.totalorder %s30, 1
      %p207 = por %p205, %p206
      %p209 = scmp.ne.s32.totalorder %s192, %s208
      %p210 = scmp.eq.s32.totalorder %s30, 0
      %p211 = por %p209, %p210
      %s212 = ssub.s32 %s31, %s43
      %s213 = ssub.s32 %s32, %s39
      %s214 = sor.u32 %s212, %s213
      %p215 = scmp.eq.s32.totalorder %s214, 0
      %s217 = sadd.s32 %s216, 1
      %s218 = scalar_select %p215, %s216, %s217
      %p221 = pneg %p215
      %p222 = scmp.eq.s32.totalorder %s24, 1
      %p223 = por %p221, %p222
      %p224 = scmp.ne.s32.totalorder %s216, %s219
      %p225 = scmp.eq.s32.totalorder %s24, 0
      %p226 = por %p224, %p225
      %p227 = scmp.ne.s32.totalorder %s216, %s219
      %p228 = scmp.eq.s32.totalorder %s29, 1
      %p229 = por %p227, %p228
      %p230 = scmp.ne.s32.totalorder %s219, %s220
      %p231 = scmp.eq.s32.totalorder %s29, 0
      %p232 = por %p230, %p231
      %p233 = scmp.ne.s32.totalorder %s219, %s220
      %p234 = scmp.eq.s32.totalorder %s30, 1
      %p235 = por %p233, %p234
      %p237 = scmp.ne.s32.totalorder %s220, %s236
      %p238 = scmp.eq.s32.totalorder %s30, 0
      %p239 = por %p237, %p238
      %p240 = scmp.le.s32.totalorder 1, %s24
      %p241 = scmp.lt.s32.totalorder %s24, 3
      %p242 = pnand %p240, %p241
      %p243 = pneg %p242
      // Predicated region
      $region9: #{tpu_custom_call.1} parent=5 // pred_check
        _
      $region10: #{tpu_custom_call.1} parent=5 // pred_check_branch
        %245 = sbr.rel (%p242) target = $region12
      $region11: #{tpu_custom_call.1} parent=5 // pred_region
        %s246 = ssub.s32 %s24, 1
        // Predicated region
        $region13: #{tpu_custom_call.1} parent=11 // pred_check
          %p247 = pneg %p85
        $region14: #{tpu_custom_call.1} parent=11 // pred_check_branch
          %249 = sbr.rel (%p247) target = $region16
        $region15: #{tpu_custom_call.1} parent=11 // pred_region
          _
        $region16: #{tpu_custom_call.1} parent=11 // pred_fallthru
          _
        // Predicated region
        $region17: #{tpu_custom_call.1} parent=11 // pred_check
          %p250 = pneg %p106
        $region18: #{tpu_custom_call.1} parent=11 // pred_check_branch
          %252 = sbr.rel (%p250) target = $region20
        $region19: #{tpu_custom_call.1} parent=11 // pred_region
          _
        $region20: #{tpu_custom_call.1} parent=11 // pred_fallthru
          _
        // Predicated region
        $region21: #{tpu_custom_call.1} parent=11 // pred_check
          %p253 = pneg %p127
        $region22: #{tpu_custom_call.1} parent=11 // pred_check_branch
          %255 = sbr.rel (%p253) target = $region24
        $region23: #{tpu_custom_call.1} parent=11 // pred_region
          %s257 = ssub.s32 256, 256
          %258 = vsyncadd [#allocation6], %s257
          %s259 = sshll.u32 [#allocation5], 4
          %s260 = int_to_ptr.vmem [resolvable:$true] %s259
          %265 = dma.hbm_to_vmem [thread:$0]  %s3, 256, %s260, [#allocation6], 64, 64, 4
        $region24: #{tpu_custom_call.1} parent=11 // pred_fallthru
          _
        // Predicated region
        $region25: #{tpu_custom_call.1} parent=11 // pred_check
          %p266 = pneg %p148
        $region26: #{tpu_custom_call.1} parent=11 // pred_check_branch
          %268 = sbr.rel (%p266) target = $region28
        $region27: #{tpu_custom_call.1} parent=11 // pred_region
          _
        $region28: #{tpu_custom_call.1} parent=11 // pred_fallthru
          _
      $region12: #{tpu_custom_call.1} parent=5 // pred_fallthru
        _
      %p269 = scmp.lt.s32.totalorder %s24, 2
      // Predicated region
      $region29: #{tpu_custom_call.1} parent=5 // pred_check
        %p270 = pneg %p269
      $region30: #{tpu_custom_call.1} parent=5 // pred_check_branch
        %272 = sbr.rel (%p270) target = $region32
      $region31: #{tpu_custom_call.1} parent=5 // pred_region
        // Predicated region
        $region33: #{tpu_custom_call.1} parent=31 // pred_check
          %p273 = pneg %p58
        $region34: #{tpu_custom_call.1} parent=31 // pred_check_branch
          %275 = sbr.rel (%p273) target = $region36
        $region35: #{tpu_custom_call.1} parent=31 // pred_region
          %s276 = sand.u32 %s48, 1
          %s277 = scalar_lea.sflag [#allocation3], %s276
          %s278 = sand.u32 %s48, 1
          %s279 = smul.addr %s278, 8
          %s280 = scalar_lea.vmem [#allocation2], %s279
          %s282 = ssub.s32 128, 128
          %283 = vsyncadd %s277, %s282
          %s284 = sadd.s32 %s32, %s31
          %s285 = smul.addr %s284, 128
          %s286 = scalar_lea.hbm %s0, %s285
          %s288 = sshll.u32 %s280, 4
          %s289 = int_to_ptr.vmem [resolvable:$true] %s288
          %291 = dma.hbm_to_vmem [thread:$0]  %s286, 128, %s289, %s277
        $region36: #{tpu_custom_call.1} parent=31 // pred_fallthru
          _
      $region32: #{tpu_custom_call.1} parent=5 // pred_fallthru
        _
      %p292 = scmp.le.s32.totalorder 1, %s24
      %p293 = scmp.lt.s32.totalorder %s24, 3
      %p294 = pnand %p292, %p293
      %p295 = pneg %p294
      // Predicated region
      $region37: #{tpu_custom_call.1} parent=5 // pred_check
        _
      $region38: #{tpu_custom_call.1} parent=5 // pred_check_branch
        %297 = sbr.rel (%p294) target = $region40
      $region39: #{tpu_custom_call.1} parent=5 // pred_region
        %s298 = ssub.s32 %s24, 1
        %s299 = sand.u32 %s51, 1
        %s300 = scalar_lea.sflag [#allocation3], %s299
        %s301 = sand.u32 %s51, 1
        %s302 = smul.addr %s301, 8
        %s303 = scalar_lea.vmem [#allocation2], %s302
        // Predicated region
        $region41: #{tpu_custom_call.1} parent=39 // pred_check
          %p304 = pneg %p64
        $region42: #{tpu_custom_call.1} parent=39 // pred_check_branch
          %306 = sbr.rel (%p304) target = $region44
        $region43: #{tpu_custom_call.1} parent=39 // pred_region
          %307 = dma.done %s300, 128
        $region44: #{tpu_custom_call.1} parent=39 // pred_fallthru
          _
        // Predicated region
        $region45: #{tpu_custom_call.1} parent=39 // pred_check
          %p308 = pneg %p127
        $region46: #{tpu_custom_call.1} parent=39 // pred_check_branch
          %310 = sbr.rel (%p308) target = $region48
        $region47: #{tpu_custom_call.1} parent=39 // pred_region
          %311 = dma.done [#allocation6], 256
        $region48: #{tpu_custom_call.1} parent=39 // pred_fallthru
          _
        %s312 = sand.u32 %s51, 1
        %s313 = scalar_lea.sflag [#allocation3], %s312
        %s314 = sand.u32 %s51, 1
        %s315 = smul.addr %s314, 8
        %s316 = scalar_lea.vmem [#allocation2], %s315
        %p317 = pneg %p64
        %p318 = pneg %p61
        %p319 = pneg %p85
        %p320 = pneg %p82
        %p321 = pneg %p106
        %p322 = pneg %p103
        %p323 = pneg %p127
        %p324 = pneg %p124
        %p325 = pneg %p148
        %p326 = pneg %p145
        %p327 = pneg %p176
        %p328 = pneg %p173
        %s329 = sand.u32 %s163, 1
        %s330 = scalar_lea.sflag [#allocation4], %s329
        %s331 = sand.u32 %s163, 1
        %s332 = smul.addr %s331, 4
        %s333 = scalar_lea.vmem [#allocation7], %s332
        %p334 = pneg %p204
        %p335 = pneg %p201
        %s336 = sand.u32 %s29, 1
        %s337 = scalar_lea.sflag [#allocation9], %s336
        %s338 = sand.u32 %s191, 1
        %s339 = smul.addr %s338, 4
        %s340 = scalar_lea.vmem [#allocation8], %s339
        %p341 = pneg %p232
        %p342 = pneg %p229
        %s343 = sand.u32 %s29, 1
        %s344 = scalar_lea.sflag [#allocation9], %s343
        %s345 = sand.u32 %s219, 1
        %s346 = smul.addr %s345, 4
        %s347 = scalar_lea.vmem [#allocation10], %s346
        %v349 = vld [vmem:[%s303] sm:$0xff]
        %v350 = vld [vmem:[%s1] sm:$0x1]
        %v351 = vld [vmem:[%s2] sm:$0x1]
        %vm352 = vcmask 261120
        %v353 = vsel %vm352, %v349, 0.0
        %354 = vadd.xlane.f32.xlu0 %v353
        %v355 = vpop.xlane.xlu0 %354
        %v356 = vrcp.pop 32.0
        %v357 = vmul.f32 %v355, %v356
        %v358 = vsub.f32 %v349, %v357
        %v359 = vmul.f32 %v358, %v358
        %v360 = vsel %vm352, %v359, 0.0
        %361 = vadd.xlane.f32.xlu0 %v360
        %v362 = vpop.xlane.xlu0 %361
        %v363 = vmul.f32 %v362, %v356
        %v364 = vadd.f32 %v363, 1e-05
        %v365 = vrsqrt.pop %v364
        %v366 = vmul.f32 %v358, %v365
        %v368 = vlaneseq
        %v369 = vshrl.u32 %v368, 7
        %v370 = vsub.s32 0, %v369
        %v371 = vrot.slane %v350, %v370
        %v373 = vmul.f32 %v366, %v371
        %v375 = vlaneseq
        %v376 = vshrl.u32 %v375, 7
        %v377 = vsub.s32 0, %v376
        %v378 = vrot.slane %v351, %v377
        %v380 = vadd.f32 %v373, %v378
        %v381 = vpack.c.bf16 %v380, %v380
        %v382 = vld [vmem:[#allocation5] sm:$0xf]
        %v383 = vld [vmem:[#allocation5 + $0x4] sm:$0xf]
        %v384 = vld [vmem:[#allocation5 + $0x8] sm:$0xf]
        %v385 = vld [vmem:[#allocation5 + $0xc] sm:$0xf]
        %v386 = vld [vmem:[%s4] sm:$0x1]
        %v388 = vlaneseq
        %v389 = vshrl.u32 %v388, 7
        %v390 = vsub.s32 0, %v389
        %v391 = vrot.slane %v386, %v390
        %v397 = vunpack.c.l.b16 %v382
        %v398 = vunpack.c.l.b16 %v383
        %v399 = vunpack.c.l.b16 %v384
        %v400 = vunpack.c.l.b16 %v385
        %v401 = vpack.c.b16 %v398, %v397
        %v402 = vpack.c.b16 %v400, %v399
        %v406 = vsel %vm352, %v381, 0
        %408 = vmatprep.subr.bf16.mxu0 0
        %409 = vmatpush1.bf16.msra.mxu0 %v401
        %410 = vmatprep.subr.bf16.mxu0 0
        %411 = vmatpush1.bf16.msra.mxu0 %v402
        %412 = vmatprep.subr.bf16.mxu0 0
        %413 = vmatpush1.bf16.msra.mxu0 0
        %414 = vmatprep.subr.bf16.mxu0 0
        %415 = vmatpush1.bf16.msra.mxu0 0
        %416 = vmatprep.subr.bf16.mxu0 0
        %417 = vmatpush1.bf16.msra.mxu0 0
        %418 = vmatprep.subr.bf16.mxu0 0
        %419 = vmatpush1.bf16.msra.mxu0 0
        %420 = vmatprep.subr.bf16.mxu0 0
        %421 = vmatpush1.bf16.msra.mxu0 0
        %422 = vmatprep.subr.bf16.mxu0 0
        %423 = vmatpush1.bf16.msra.mxu0 0
        %424 = vmatprep.subr.bf16.mxu0 0
        %425 = vmatpush1.bf16.msra.mxu0 0
        %426 = vmatprep.subr.bf16.mxu0 0
        %427 = vmatpush1.bf16.msra.mxu0 0
        %428 = vmatprep.subr.bf16.mxu0 0
        %429 = vmatpush1.bf16.msra.mxu0 0
        %430 = vmatprep.subr.bf16.mxu0 0
        %431 = vmatpush1.bf16.msra.mxu0 0
        %432 = vmatprep.subr.bf16.mxu0 0
        %433 = vmatpush1.bf16.msra.mxu0 0
        %434 = vmatprep.subr.bf16.mxu0 0
        %435 = vmatpush1.bf16.msra.mxu0 0
        %436 = vmatprep.subr.bf16.mxu0 0
        %437 = vmatpush1.bf16.msra.mxu0 0
        %438 = vmatprep.subr.bf16.mxu0 0
        %439 = vmatpush1.bf16.msra.mxu0 0
        %440 = vmatprep.mubr.bf16.mxu0 0
        %441 = vmatmul.mubr.bf16.gmra.mrb[0].mxu0 %v406
        %v442 = vpop.f32.mrb[0].mxu0
        %v443 = vadd.f32 %v391, %v442
        %v444 = vpop.f32.mrb[0].mxu0
        %v445 = vpop.f32.mrb[0].mxu0
        %v446 = vpop.f32.mrb[0].mxu0
        %447 = vdwg.mxu0
        %v448 = vmul.f32 %v443, 0.25
        %v449 = vpack.c.bf16 %v448, %v448
        %vm450 = vcmask 257024
        %451 = vst.msk [vmem:[%s333] sm:$0xf] %vm450, %v449
        %v452 = vpack.c.bf16 %v443, %v443
        %v454 = vunpack.c.l.b16 %v452
        %v455 = vpack.c.b16 %v454, %v454
        %456 = vrot.lane.b32.xlu0 %v455, 96
        %v457 = vpop.permute.xlu0 %456
        %459 = vst.msk [vmem:[%s340] sm:$0xf] %vm450, %v457
        %460 = vrot.lane.b32.xlu0 %v455, 64
        %v461 = vpop.permute.xlu0 %460
        %463 = vst.msk [vmem:[%s347] sm:$0xf] %vm450, %v461
        %s464 = sand.u32 %s163, 1
        %s465 = scalar_lea.sflag [#allocation4], %s464
        %s466 = sand.u32 %s163, 1
        %s467 = smul.addr %s466, 4
        %s468 = scalar_lea.vmem [#allocation7], %s467
        %s469 = sand.u32 %s29, 1
        %s470 = scalar_lea.sflag [#allocation9], %s469
        %s471 = sand.u32 %s191, 1
        %s472 = smul.addr %s471, 4
        %s473 = scalar_lea.vmem [#allocation8], %s472
        %s474 = sand.u32 %s29, 1
        %s475 = scalar_lea.sflag [#allocation9], %s474
        %s476 = sand.u32 %s219, 1
        %s477 = smul.addr %s476, 4
        %s478 = scalar_lea.vmem [#allocation10], %s477
        // Predicated region
        $region49: #{tpu_custom_call.1} parent=39 // pred_check
          %p479 = pneg %p173
        $region50: #{tpu_custom_call.1} parent=39 // pred_check_branch
          %481 = sbr.rel (%p479) target = $region52
        $region51: #{tpu_custom_call.1} parent=39 // pred_region
          %s483 = ssub.s32 64, 64
          %484 = vsyncadd %s465, %s483
          %s485 = sadd.s32 %s34, %s33
          %s486 = smul.addr %s485, 64
          %s487 = scalar_lea.hbm %s5, %s486
          %s489 = sshll.u32 %s468, 4
          %s490 = int_to_ptr.vmem [resolvable:$true] %s489
          %492 = dma.vmem_to_hbm [thread:$0]  %s490, 64, %s487, %s465
        $region52: #{tpu_custom_call.1} parent=39 // pred_fallthru
          _
        // Predicated region
        $region53: #{tpu_custom_call.1} parent=39 // pred_check
          %p493 = pneg %p201
        $region54: #{tpu_custom_call.1} parent=39 // pred_check_branch
          %495 = sbr.rel (%p493) target = $region56
        $region55: #{tpu_custom_call.1} parent=39 // pred_region
          %s497 = ssub.s32 64, 64
          %498 = vsyncadd %s470, %s497
          %s499 = sadd.s32 %s34, %s33
          %s500 = smul.addr %s499, 64
          %s501 = scalar_lea.hbm %s6, %s500
          %s503 = sshll.u32 %s473, 4
          %s504 = int_to_ptr.vmem [resolvable:$true] %s503
          %506 = dma.vmem_to_hbm [thread:$0]  %s504, 64, %s501, %s470
        $region56: #{tpu_custom_call.1} parent=39 // pred_fallthru
          _
        // Predicated region
        $region57: #{tpu_custom_call.1} parent=39 // pred_check
          %p507 = pneg %p229
        $region58: #{tpu_custom_call.1} parent=39 // pred_check_branch
          %509 = sbr.rel (%p507) target = $region60
        $region59: #{tpu_custom_call.1} parent=39 // pred_region
          %s511 = ssub.s32 64, 64
          %512 = vsyncadd %s475, %s511
          %s513 = sadd.s32 %s34, %s33
          %s514 = smul.addr %s513, 64
          %s515 = scalar_lea.hbm %s7, %s514
          %s517 = sshll.u32 %s478, 4
          %s518 = int_to_ptr.vmem [resolvable:$true] %s517
          %520 = dma.vmem_to_hbm [thread:$0]  %s518, 64, %s515, %s475
        $region60: #{tpu_custom_call.1} parent=39 // pred_fallthru
          _
      $region40: #{tpu_custom_call.1} parent=5 // pred_fallthru
        _
      %p521 = scmp.le.s32.totalorder 2, %s24
      // Predicated region
      $region61: #{tpu_custom_call.1} parent=5 // pred_check
        %p522 = pneg %p521
      $region62: #{tpu_custom_call.1} parent=5 // pred_check_branch
        %524 = sbr.rel (%p522) target = $region64
      $region63: #{tpu_custom_call.1} parent=5 // pred_region
        %s525 = ssub.s32 %s24, 2
        // Predicated region
        $region65: #{tpu_custom_call.1} parent=63 // pred_check
          %p526 = pneg %p179
        $region66: #{tpu_custom_call.1} parent=63 // pred_check_branch
          %528 = sbr.rel (%p526) target = $region68
        $region67: #{tpu_custom_call.1} parent=63 // pred_region
          %s529 = sand.u32 %s164, 1
          %s530 = scalar_lea.sflag [#allocation4], %s529
          %s531 = sand.u32 %s164, 1
          %s532 = smul.addr %s531, 4
          %s533 = scalar_lea.vmem [#allocation7], %s532
          %534 = dma.done %s530, 64
        $region68: #{tpu_custom_call.1} parent=63 // pred_fallthru
          _
        // Predicated region
        $region69: #{tpu_custom_call.1} parent=63 // pred_check
          %p535 = pneg %p207
        $region70: #{tpu_custom_call.1} parent=63 // pred_check_branch
          %537 = sbr.rel (%p535) target = $region72
        $region71: #{tpu_custom_call.1} parent=63 // pred_region
          %s538 = sand.u32 %s30, 1
          %s539 = scalar_lea.sflag [#allocation9], %s538
          %s540 = sand.u32 %s192, 1
          %s541 = smul.addr %s540, 4
          %s542 = scalar_lea.vmem [#allocation8], %s541
          %543 = dma.done %s539, 64
        $region72: #{tpu_custom_call.1} parent=63 // pred_fallthru
          _
        // Predicated region
        $region73: #{tpu_custom_call.1} parent=63 // pred_check
          %p544 = pneg %p235
        $region74: #{tpu_custom_call.1} parent=63 // pred_check_branch
          %546 = sbr.rel (%p544) target = $region76
        $region75: #{tpu_custom_call.1} parent=63 // pred_region
          %s547 = sand.u32 %s30, 1
          %s548 = scalar_lea.sflag [#allocation9], %s547
          %s549 = sand.u32 %s220, 1
          %s550 = smul.addr %s549, 4
          %s551 = scalar_lea.vmem [#allocation10], %s550
          %552 = dma.done %s548, 64
        $region76: #{tpu_custom_call.1} parent=63 // pred_fallthru
          _
      $region64: #{tpu_custom_call.1} parent=5 // pred_fallthru
        _
    $region6: #{tpu_custom_call.1} parent=1 // loop_footer
      %s28 = sadd.s32 1, %s24
    $region7: #{tpu_custom_call.1} parent=1 // loop_footer_branch
      %23 = sbr.rel target = $region3
    $region8: #{tpu_custom_call.1} parent=1 // loop_exit
      _
    %553 = vsyncpa [#allocation3], 1
    %s554 = scalar_lea.sflag [#allocation3], 1
    %555 = vsyncpa %s554, 1
    %556 = vsyncpa [#allocation6], 1
    %557 = vsyncpa [#allocation4], 1
    %s558 = scalar_lea.sflag [#allocation4], 1
    %559 = vsyncpa %s558, 1
    %560 = vsyncpa [#allocation9], 1
    %s561 = scalar_lea.sflag [#allocation9], 1
    %562 = vsyncpa %s561, 1

</llo_original>
